<compile_context>
chip_gen: v5e
topology: v5e:2x2
jax: 0.10.0
libtpu: 0.0.40
codegen_flags: <defaults>
</compile_context>

<pallas_src>
import functools

import numpy as np
import jax
import jax.numpy as jnp
from jax import lax
from jax.experimental import pallas as pl
from jax.experimental.pallas import tpu as pltpu


def _proposal_kernel(ov_ref, rank_ref, inv_rank_ref, src_ref, tgt_ref, ovs_ref,
                     out_src_ref, out_tgt_ref, out_ov_ref, count_ref,
                     *, num_proposals, overlap_threshold, decay_step):
    R, C = ov_ref.shape
    NE = R * C
    P = num_proposals
    BIG = jnp.int32(2 ** 30)

    ov = ov_ref[...]          # (R, C) f32, padding lanes = -inf
    rank = rank_ref[...]      # (R, C) i32, permutation of [0, NE)

    # ---- threshold decay (closed form of the PyTorch `while True` loop) ----
    # NOTE: f32 closed form; a one-ULP edge case may differ by one decay step
    # from the sequential python-float loop (benign).
    max_ov = jnp.max(ov)
    thr0 = jnp.float32(overlap_threshold)
    decay = jnp.float32(decay_step)
    k = jnp.where(max_ov > thr0, jnp.float32(0.0),
                  jnp.floor((thr0 - max_ov) / decay) + jnp.float32(1.0))
    thr_eff = thr0 - k * decay

    mask = ov > thr_eff                                   # (R, C) bool
    num_masked = jnp.sum(mask.astype(jnp.int32))
    L = jnp.minimum(num_masked, jnp.int32(P))
    count_ref[0] = L

    keep_all = num_masked <= jnp.int32(P)

    # Unique int32 selection keys (smaller key = selected first):
    #   keep-all path  -> original flat element index (preserves input order)
    #   subsample path -> wrapper-generated random / Gumbel-top-k rank
    row_iota = lax.broadcasted_iota(jnp.int32, (R, C), 0)
    lane_iota = lax.broadcasted_iota(jnp.int32, (R, C), 1)
    flat_idx = row_iota * C + lane_iota
    key = jnp.where(keep_all, flat_idx, rank)
    key = jnp.where(mask, key, BIG)

    # ---- P-step streaming selection: ONE cross-lane reduce per proposal ----
    for p in range(P):
        win_key = jnp.min(key)                   # fused min+argmin (keys unique)
        valid = jnp.int32(p) < L
        safe_key = jnp.minimum(win_key, jnp.int32(NE - 1))   # in-bounds clamp
        # rank -> element index lookup + payload gather on the scalar port.
        win_idx = jnp.where(keep_all, safe_key, inv_rank_ref[safe_key])
        out_src_ref[p] = jnp.where(valid, src_ref[win_idx], jnp.int32(-1))
        out_tgt_ref[p] = jnp.where(valid, tgt_ref[win_idx], jnp.int32(-1))
        out_ov_ref[p] = jnp.where(valid, ovs_ref[win_idx], jnp.float32(0.0))
        key = jnp.where(key == win_key, BIG, key)   # drop winner (VPU select)


@functools.partial(
    jax.jit,
    static_argnames=("num_proposals", "overlap_threshold", "decay_step",
                     "probabilistic"))
def _superpoint_proposal(src, tgt, ov, key, *, num_proposals,
                         overlap_threshold, decay_step, probabilistic):
    N = ov.shape[0]
    P = num_proposals
    C = 128
    R = max(1, pl.cdiv(N, C))
    NE = R * C
    pad = NE - N

    # Flat SMEM payloads; lane-dense (R, 128) VMEM tensors for the vector phase.
    src_flat = jnp.pad(src.astype(jnp.int32), (0, pad), constant_values=-1)
    tgt_flat = jnp.pad(tgt.astype(jnp.int32), (0, pad), constant_values=-1)
    ov_flat = jnp.pad(ov.astype(jnp.float32), (0, pad),
                      constant_values=-jnp.inf)     # -inf: can never be masked in
    ov2 = ov_flat.reshape(R, C)

    # order[r] = element picked r-th (all randomness lives outside the kernel).
    if probabilistic:
        # Gumbel top-k == weighted sampling without replacement (p ~ overlap).
        # TODO(synk): survivors with non-positive overlap get a clamped tiny
        # weight rather than torch.multinomial's exact zero probability.
        u = jax.random.uniform(key, (NE,), dtype=jnp.float32,
                               minval=1e-12, maxval=1.0)
        gumbel = -jnp.log(-jnp.log(u))
        score = jnp.log(jnp.maximum(ov_flat, jnp.float32(1e-30))) + gumbel
        order = jnp.argsort(-score)                 # descending Gumbel score
    else:
        order = jax.random.permutation(key, NE)      # uniform w/o replacement
    order = order.astype(jnp.int32)
    rank = jnp.argsort(order).astype(jnp.int32)      # rank[i] = selection position
    rank2 = rank.reshape(R, C)

    kernel = functools.partial(
        _proposal_kernel,
        num_proposals=P,
        overlap_threshold=float(overlap_threshold),
        decay_step=float(decay_step))

    vmem = pl.BlockSpec(memory_space=pltpu.MemorySpace.VMEM)
    smem = pl.BlockSpec(memory_space=pltpu.MemorySpace.SMEM)

    out_src, out_tgt, out_ov, count = pl.pallas_call(
        kernel,
        out_shape=(
            jax.ShapeDtypeStruct((P,), jnp.int32),
            jax.ShapeDtypeStruct((P,), jnp.int32),
            jax.ShapeDtypeStruct((P,), jnp.float32),
            jax.ShapeDtypeStruct((1,), jnp.int32),
        ),
        in_specs=[vmem, vmem, smem, smem, smem, smem],
        out_specs=(smem, smem, smem, smem),
    )(ov2, rank2, order, src_flat, tgt_flat, ov_flat)

    return out_src, out_tgt, out_ov, count[0]


def superpoint_proposal_generator(gt_src_corr_indices, gt_tgt_corr_indices,
                                  gt_corr_overlaps, *, key,
                                  num_proposals=8, overlap_threshold=0.3,
                                  decay_step=0.05, probabilistic=False):
    """Returns (src_indices[P], tgt_indices[P], overlaps[P], count).

    Rows >= count are padding (-1 / -1 / 0.0).  Indices are int32 (TPU-native
    equivalent of PyTorch's int64 LongTensor).
    """
    # TODO(synk): for batched use (many correspondence sets) add a grid=(B,)
    # axis with dimension_semantics=("parallel",) to engage both v7x cores;
    # for multi-million-N raise pltpu.CompilerParams(vmem_limit_bytes=...).
    return _superpoint_proposal(
        gt_src_corr_indices, gt_tgt_corr_indices, gt_corr_overlaps, key,
        num_proposals=int(num_proposals),
        overlap_threshold=float(overlap_threshold),
        decay_step=float(decay_step),
        probabilistic=bool(probabilistic))


if __name__ == "__main__":
    key = jax.random.PRNGKey(0)
    k1, k2, k3, k4, k5, k6 = jax.random.split(key, 6)

    N = 200                    # number of candidate superpoint correspondences
    num_superpoints = 64
    overlap_threshold = 0.3
    num_proposals = 8

    gt_src = jax.random.randint(k1, (N,), 0, num_superpoints, dtype=jnp.int32)
    gt_tgt = jax.random.randint(k2, (N,), 0, num_superpoints, dtype=jnp.int32)
    gt_ov = jax.random.uniform(k3, (N,), dtype=jnp.float32)

    gt_src_np = np.asarray(gt_src)
    gt_tgt_np = np.asarray(gt_tgt)
    gt_ov_np = np.asarray(gt_ov)

    # --- uniform subsampling path (num_masked > P) ---
    src_sel, tgt_sel, ov_sel, count = superpoint_proposal_generator(
        gt_src, gt_tgt, gt_ov, key=k4,
        num_proposals=num_proposals, overlap_threshold=overlap_threshold,
        decay_step=0.05, probabilistic=False)
    jax.block_until_ready((src_sel, tgt_sel, ov_sel, count))
    c = int(count)
    assert c == num_proposals
    assert bool(jnp.all(ov_sel[:c] > overlap_threshold))
    assert bool(jnp.all(src_sel[:c] >= 0)) and bool(jnp.all(tgt_sel[:c] >= 0))
    assert bool(np.all(np.isin(np.asarray(ov_sel[:c]), gt_ov_np)))

    # --- probabilistic (overlap-weighted) subsampling path ---
    src_p, tgt_p, ov_p, count_p = superpoint_proposal_generator(
        gt_src, gt_tgt, gt_ov, key=k5,
        num_proposals=num_proposals, overlap_threshold=overlap_threshold,
        decay_step=0.05, probabilistic=True)
    jax.block_until_ready((src_p, tgt_p, ov_p, count_p))
    cp = int(count_p)
    assert cp == num_proposals
    assert bool(jnp.all(ov_p[:cp] > overlap_threshold))
    assert bool(np.all(np.isin(np.asarray(ov_p[:cp]), gt_ov_np)))

    # --- keep-all path (few survivors -> original order preserved) ---
    hi_thr = 0.98
    src_k, tgt_k, ov_k, count_k = superpoint_proposal_generator(
        gt_src, gt_tgt, gt_ov, key=k6,
        num_proposals=num_proposals, overlap_threshold=hi_thr,
        decay_step=0.05, probabilistic=False)
    jax.block_until_ready((src_k, tgt_k, ov_k, count_k))
    ck = int(count_k)
    mask = gt_ov_np > hi_thr
    m = int(mask.sum())
    if 0 < m <= num_proposals:
        assert ck == m
        assert np.array_equal(np.asarray(src_k[:ck]), gt_src_np[mask])
        assert np.array_equal(np.asarray(tgt_k[:ck]), gt_tgt_np[mask])
        assert np.allclose(np.asarray(ov_k[:ck]), gt_ov_np[mask])
    assert ck >= 1

    # --- threshold-decay path (no survivors at the initial threshold) ---
    src_d, tgt_d, ov_d, count_d = superpoint_proposal_generator(
        gt_src, gt_tgt, gt_ov, key=k4,
        num_proposals=num_proposals, overlap_threshold=1.5,   # must decay
        decay_step=0.05, probabilistic=False)
    jax.block_until_ready((src_d, tgt_d, ov_d, count_d))
    cd = int(count_d)
    assert cd >= 1
    assert bool(jnp.all(src_d[:cd] >= 0)) and bool(jnp.all(tgt_d[:cd] >= 0))
    assert bool(np.all(np.isin(np.asarray(ov_d[:cd]), gt_ov_np)))

    print("KERNEL_OK")
</pallas_src>

<mosaic_0001>
module attributes {stable_mosaic.version = 11 : i64} {
  func.func @_proposal_kernel(%arg0: memref<2x128xf32, #tpu.memory_space<vmem>>, %arg1: memref<2x128xi32, #tpu.memory_space<vmem>>, %arg2: memref<256xi32, #tpu.memory_space<smem>>, %arg3: memref<256xi32, #tpu.memory_space<smem>>, %arg4: memref<256xi32, #tpu.memory_space<smem>>, %arg5: memref<256xf32, #tpu.memory_space<smem>>, %arg6: memref<8xi32, #tpu.memory_space<smem>>, %arg7: memref<8xi32, #tpu.memory_space<smem>>, %arg8: memref<8xf32, #tpu.memory_space<smem>>, %arg9: memref<1xi32, #tpu.memory_space<smem>>) attributes {dimension_semantics = [], scalar_prefetch = 0 : i64, scratch_operands = 0 : i64, tpu.core_type = #tpu.core_type<tc>} {
    %c0 = arith.constant 0 : index
    %c0_0 = arith.constant 0 : index
    %0 = vector.load %arg0[%c0, %c0_0] : memref<2x128xf32, #tpu.memory_space<vmem>>, vector<2x128xf32>
    %c0_1 = arith.constant 0 : index
    %c0_2 = arith.constant 0 : index
    %1 = vector.load %arg1[%c0_1, %c0_2] : memref<2x128xi32, #tpu.memory_space<vmem>>, vector<2x128xi32>
    %2 = vector.shape_cast %0 : vector<2x128xf32> to vector<1x2x128xf32>
    %cst = arith.constant dense<0xFF800000> : vector<1xf32>
    %3 = vector.multi_reduction <maximumf>, %2, %cst [1, 2] : vector<1x2x128xf32> to vector<1xf32>
    %4 = vector.shape_cast %3 : vector<1xf32> to vector<1x1x1xf32>
    %5 = vector.extract %4[0, 0, 0] : f32 from vector<1x1x1xf32>
    %cst_3 = arith.constant 3.000000e-01 : f32
    %6 = arith.cmpf ogt, %5, %cst_3 : f32
    %cst_4 = arith.constant 3.000000e-01 : f32
    %7 = arith.subf %cst_4, %5 : f32
    %cst_5 = arith.constant 5.000000e-02 : f32
    %8 = arith.divf %7, %cst_5 : f32
    %9 = math.floor %8 : f32
    %cst_6 = arith.constant 1.000000e+00 : f32
    %10 = arith.addf %9, %cst_6 : f32
    %cst_7 = arith.constant 0.000000e+00 : f32
    %11 = arith.select %6, %cst_7, %10 : f32
    %cst_8 = arith.constant 5.000000e-02 : f32
    %12 = arith.mulf %11, %cst_8 : f32
    %cst_9 = arith.constant 3.000000e-01 : f32
    %13 = arith.subf %cst_9, %12 : f32
    %14 = vector.broadcast %13 : f32 to vector<2x128xf32>
    %15 = arith.cmpf ogt, %0, %14 : vector<2x128xf32>
    %16 = arith.extui %15 : vector<2x128xi1> to vector<2x128xi32>
    %17 = vector.shape_cast %16 : vector<2x128xi32> to vector<1x2x128xi32>
    %cst_10 = arith.constant dense<0> : vector<1xi32>
    %18 = vector.multi_reduction <add>, %17, %cst_10 [1, 2] : vector<1x2x128xi32> to vector<1xi32>
    %19 = vector.shape_cast %18 : vector<1xi32> to vector<1x1x1xi32>
    %20 = vector.extract %19[0, 0, 0] : i32 from vector<1x1x1xi32>
    %c8_i32 = arith.constant 8 : i32
    %21 = arith.minsi %20, %c8_i32 : i32
    %c0_11 = arith.constant 0 : index
    %22 = memref.load %arg9[%c0_11] : memref<1xi32, #tpu.memory_space<smem>>
    memref.store %21, %arg9[%c0_11] : memref<1xi32, #tpu.memory_space<smem>>
    %c8_i32_12 = arith.constant 8 : i32
    %23 = arith.cmpi sle, %20, %c8_i32_12 : i32
    %24 = tpu.iota {dimensions = array<i32: 0>} : vector<2x128xi32>
    %25 = tpu.iota {dimensions = array<i32: 1>} : vector<2x128xi32>
    %c128_i32 = arith.constant 128 : i32
    %26 = vector.broadcast %c128_i32 : i32 to vector<2x128xi32>
    %27 = arith.muli %24, %26 : vector<2x128xi32>
    %28 = arith.addi %27, %25 : vector<2x128xi32>
    %29 = arith.select %23, %28, %1 : vector<2x128xi32>
    %c1073741824_i32 = arith.constant 1073741824 : i32
    %30 = vector.broadcast %c1073741824_i32 : i32 to vector<2x128xi32>
    %31 = arith.select %15, %29, %30 : vector<2x128xi1>, vector<2x128xi32>
    %32 = vector.shape_cast %31 : vector<2x128xi32> to vector<1x2x128xi32>
    %cst_13 = arith.constant dense<2147483647> : vector<1xi32>
    %33 = vector.multi_reduction <minsi>, %32, %cst_13 [1, 2] : vector<1x2x128xi32> to vector<1xi32>
    %34 = vector.shape_cast %33 : vector<1xi32> to vector<1x1x1xi32>
    %35 = vector.extract %34[0, 0, 0] : i32 from vector<1x1x1xi32>
    %c0_i32 = arith.constant 0 : i32
    %36 = arith.cmpi slt, %c0_i32, %21 : i32
    %c255_i32 = arith.constant 255 : i32
    %37 = arith.minsi %35, %c255_i32 : i32
    %38 = arith.index_cast %37 : i32 to index
    %39 = memref.load %arg2[%38] : memref<256xi32, #tpu.memory_space<smem>>
    %40 = arith.select %23, %37, %39 : i32
    %41 = arith.index_cast %40 : i32 to index
    %42 = memref.load %arg3[%41] : memref<256xi32, #tpu.memory_space<smem>>
    %c-1_i32 = arith.constant -1 : i32
    %43 = arith.select %36, %42, %c-1_i32 : i32
    %c0_14 = arith.constant 0 : index
    %44 = memref.load %arg6[%c0_14] : memref<8xi32, #tpu.memory_space<smem>>
    memref.store %43, %arg6[%c0_14] : memref<8xi32, #tpu.memory_space<smem>>
    %45 = arith.index_cast %40 : i32 to index
    %46 = memref.load %arg4[%45] : memref<256xi32, #tpu.memory_space<smem>>
    %c-1_i32_15 = arith.constant -1 : i32
    %47 = arith.select %36, %46, %c-1_i32_15 : i32
    %c0_16 = arith.constant 0 : index
    %48 = memref.load %arg7[%c0_16] : memref<8xi32, #tpu.memory_space<smem>>
    memref.store %47, %arg7[%c0_16] : memref<8xi32, #tpu.memory_space<smem>>
    %49 = arith.index_cast %40 : i32 to index
    %50 = memref.load %arg5[%49] : memref<256xf32, #tpu.memory_space<smem>>
    %cst_17 = arith.constant 0.000000e+00 : f32
    %51 = arith.select %36, %50, %cst_17 : f32
    %c0_18 = arith.constant 0 : index
    %52 = memref.load %arg8[%c0_18] : memref<8xf32, #tpu.memory_space<smem>>
    memref.store %51, %arg8[%c0_18] : memref<8xf32, #tpu.memory_space<smem>>
    %53 = vector.broadcast %35 : i32 to vector<2x128xi32>
    %54 = arith.cmpi eq, %31, %53 : vector<2x128xi32>
    %c1073741824_i32_19 = arith.constant 1073741824 : i32
    %55 = vector.broadcast %c1073741824_i32_19 : i32 to vector<2x128xi32>
    %56 = arith.select %54, %55, %31 : vector<2x128xi1>, vector<2x128xi32>
    %57 = vector.shape_cast %56 : vector<2x128xi32> to vector<1x2x128xi32>
    %cst_20 = arith.constant dense<2147483647> : vector<1xi32>
    %58 = vector.multi_reduction <minsi>, %57, %cst_20 [1, 2] : vector<1x2x128xi32> to vector<1xi32>
    %59 = vector.shape_cast %58 : vector<1xi32> to vector<1x1x1xi32>
    %60 = vector.extract %59[0, 0, 0] : i32 from vector<1x1x1xi32>
    %c1_i32 = arith.constant 1 : i32
    %61 = arith.cmpi slt, %c1_i32, %21 : i32
    %c255_i32_21 = arith.constant 255 : i32
    %62 = arith.minsi %60, %c255_i32_21 : i32
    %63 = arith.index_cast %62 : i32 to index
    %64 = memref.load %arg2[%63] : memref<256xi32, #tpu.memory_space<smem>>
    %65 = arith.select %23, %62, %64 : i32
    %66 = arith.index_cast %65 : i32 to index
    %67 = memref.load %arg3[%66] : memref<256xi32, #tpu.memory_space<smem>>
    %c-1_i32_22 = arith.constant -1 : i32
    %68 = arith.select %61, %67, %c-1_i32_22 : i32
    %c1 = arith.constant 1 : index
    %69 = memref.load %arg6[%c1] : memref<8xi32, #tpu.memory_space<smem>>
    memref.store %68, %arg6[%c1] : memref<8xi32, #tpu.memory_space<smem>>
    %70 = arith.index_cast %65 : i32 to index
    %71 = memref.load %arg4[%70] : memref<256xi32, #tpu.memory_space<smem>>
    %c-1_i32_23 = arith.constant -1 : i32
    %72 = arith.select %61, %71, %c-1_i32_23 : i32
    %c1_24 = arith.constant 1 : index
    %73 = memref.load %arg7[%c1_24] : memref<8xi32, #tpu.memory_space<smem>>
    memref.store %72, %arg7[%c1_24] : memref<8xi32, #tpu.memory_space<smem>>
    %74 = arith.index_cast %65 : i32 to index
    %75 = memref.load %arg5[%74] : memref<256xf32, #tpu.memory_space<smem>>
    %cst_25 = arith.constant 0.000000e+00 : f32
    %76 = arith.select %61, %75, %cst_25 : f32
    %c1_26 = arith.constant 1 : index
    %77 = memref.load %arg8[%c1_26] : memref<8xf32, #tpu.memory_space<smem>>
    memref.store %76, %arg8[%c1_26] : memref<8xf32, #tpu.memory_space<smem>>
    %78 = vector.broadcast %60 : i32 to vector<2x128xi32>
    %79 = arith.cmpi eq, %56, %78 : vector<2x128xi32>
    %c1073741824_i32_27 = arith.constant 1073741824 : i32
    %80 = vector.broadcast %c1073741824_i32_27 : i32 to vector<2x128xi32>
    %81 = arith.select %79, %80, %56 : vector<2x128xi1>, vector<2x128xi32>
    %82 = vector.shape_cast %81 : vector<2x128xi32> to vector<1x2x128xi32>
    %cst_28 = arith.constant dense<2147483647> : vector<1xi32>
    %83 = vector.multi_reduction <minsi>, %82, %cst_28 [1, 2] : vector<1x2x128xi32> to vector<1xi32>
    %84 = vector.shape_cast %83 : vector<1xi32> to vector<1x1x1xi32>
    %85 = vector.extract %84[0, 0, 0] : i32 from vector<1x1x1xi32>
    %c2_i32 = arith.constant 2 : i32
    %86 = arith.cmpi slt, %c2_i32, %21 : i32
    %c255_i32_29 = arith.constant 255 : i32
    %87 = arith.minsi %85, %c255_i32_29 : i32
    %88 = arith.index_cast %87 : i32 to index
    %89 = memref.load %arg2[%88] : memref<256xi32, #tpu.memory_space<smem>>
    %90 = arith.select %23, %87, %89 : i32
    %91 = arith.index_cast %90 : i32 to index
    %92 = memref.load %arg3[%91] : memref<256xi32, #tpu.memory_space<smem>>
    %c-1_i32_30 = arith.constant -1 : i32
    %93 = arith.select %86, %92, %c-1_i32_30 : i32
    %c2 = arith.constant 2 : index
    %94 = memref.load %arg6[%c2] : memref<8xi32, #tpu.memory_space<smem>>
    memref.store %93, %arg6[%c2] : memref<8xi32, #tpu.memory_space<smem>>
    %95 = arith.index_cast %90 : i32 to index
    %96 = memref.load %arg4[%95] : memref<256xi32, #tpu.memory_space<smem>>
    %c-1_i32_31 = arith.constant -1 : i32
    %97 = arith.select %86, %96, %c-1_i32_31 : i32
    %c2_32 = arith.constant 2 : index
    %98 = memref.load %arg7[%c2_32] : memref<8xi32, #tpu.memory_space<smem>>
    memref.store %97, %arg7[%c2_32] : memref<8xi32, #tpu.memory_space<smem>>
    %99 = arith.index_cast %90 : i32 to index
    %100 = memref.load %arg5[%99] : memref<256xf32, #tpu.memory_space<smem>>
    %cst_33 = arith.constant 0.000000e+00 : f32
    %101 = arith.select %86, %100, %cst_33 : f32
    %c2_34 = arith.constant 2 : index
    %102 = memref.load %arg8[%c2_34] : memref<8xf32, #tpu.memory_space<smem>>
    memref.store %101, %arg8[%c2_34] : memref<8xf32, #tpu.memory_space<smem>>
    %103 = vector.broadcast %85 : i32 to vector<2x128xi32>
    %104 = arith.cmpi eq, %81, %103 : vector<2x128xi32>
    %c1073741824_i32_35 = arith.constant 1073741824 : i32
    %105 = vector.broadcast %c1073741824_i32_35 : i32 to vector<2x128xi32>
    %106 = arith.select %104, %105, %81 : vector<2x128xi1>, vector<2x128xi32>
    %107 = vector.shape_cast %106 : vector<2x128xi32> to vector<1x2x128xi32>
    %cst_36 = arith.constant dense<2147483647> : vector<1xi32>
    %108 = vector.multi_reduction <minsi>, %107, %cst_36 [1, 2] : vector<1x2x128xi32> to vector<1xi32>
    %109 = vector.shape_cast %108 : vector<1xi32> to vector<1x1x1xi32>
    %110 = vector.extract %109[0, 0, 0] : i32 from vector<1x1x1xi32>
    %c3_i32 = arith.constant 3 : i32
    %111 = arith.cmpi slt, %c3_i32, %21 : i32
    %c255_i32_37 = arith.constant 255 : i32
    %112 = arith.minsi %110, %c255_i32_37 : i32
    %113 = arith.index_cast %112 : i32 to index
    %114 = memref.load %arg2[%113] : memref<256xi32, #tpu.memory_space<smem>>
    %115 = arith.select %23, %112, %114 : i32
    %116 = arith.index_cast %115 : i32 to index
    %117 = memref.load %arg3[%116] : memref<256xi32, #tpu.memory_space<smem>>
    %c-1_i32_38 = arith.constant -1 : i32
    %118 = arith.select %111, %117, %c-1_i32_38 : i32
    %c3 = arith.constant 3 : index
    %119 = memref.load %arg6[%c3] : memref<8xi32, #tpu.memory_space<smem>>
    memref.store %118, %arg6[%c3] : memref<8xi32, #tpu.memory_space<smem>>
    %120 = arith.index_cast %115 : i32 to index
    %121 = memref.load %arg4[%120] : memref<256xi32, #tpu.memory_space<smem>>
    %c-1_i32_39 = arith.constant -1 : i32
    %122 = arith.select %111, %121, %c-1_i32_39 : i32
    %c3_40 = arith.constant 3 : index
    %123 = memref.load %arg7[%c3_40] : memref<8xi32, #tpu.memory_space<smem>>
    memref.store %122, %arg7[%c3_40] : memref<8xi32, #tpu.memory_space<smem>>
    %124 = arith.index_cast %115 : i32 to index
    %125 = memref.load %arg5[%124] : memref<256xf32, #tpu.memory_space<smem>>
    %cst_41 = arith.constant 0.000000e+00 : f32
    %126 = arith.select %111, %125, %cst_41 : f32
    %c3_42 = arith.constant 3 : index
    %127 = memref.load %arg8[%c3_42] : memref<8xf32, #tpu.memory_space<smem>>
    memref.store %126, %arg8[%c3_42] : memref<8xf32, #tpu.memory_space<smem>>
    %128 = vector.broadcast %110 : i32 to vector<2x128xi32>
    %129 = arith.cmpi eq, %106, %128 : vector<2x128xi32>
    %c1073741824_i32_43 = arith.constant 1073741824 : i32
    %130 = vector.broadcast %c1073741824_i32_43 : i32 to vector<2x128xi32>
    %131 = arith.select %129, %130, %106 : vector<2x128xi1>, vector<2x128xi32>
    %132 = vector.shape_cast %131 : vector<2x128xi32> to vector<1x2x128xi32>
    %cst_44 = arith.constant dense<2147483647> : vector<1xi32>
    %133 = vector.multi_reduction <minsi>, %132, %cst_44 [1, 2] : vector<1x2x128xi32> to vector<1xi32>
    %134 = vector.shape_cast %133 : vector<1xi32> to vector<1x1x1xi32>
    %135 = vector.extract %134[0, 0, 0] : i32 from vector<1x1x1xi32>
    %c4_i32 = arith.constant 4 : i32
    %136 = arith.cmpi slt, %c4_i32, %21 : i32
    %c255_i32_45 = arith.constant 255 : i32
    %137 = arith.minsi %135, %c255_i32_45 : i32
    %138 = arith.index_cast %137 : i32 to index
    %139 = memref.load %arg2[%138] : memref<256xi32, #tpu.memory_space<smem>>
    %140 = arith.select %23, %137, %139 : i32
    %141 = arith.index_cast %140 : i32 to index
    %142 = memref.load %arg3[%141] : memref<256xi32, #tpu.memory_space<smem>>
    %c-1_i32_46 = arith.constant -1 : i32
    %143 = arith.select %136, %142, %c-1_i32_46 : i32
    %c4 = arith.constant 4 : index
    %144 = memref.load %arg6[%c4] : memref<8xi32, #tpu.memory_space<smem>>
    memref.store %143, %arg6[%c4] : memref<8xi32, #tpu.memory_space<smem>>
    %145 = arith.index_cast %140 : i32 to index
    %146 = memref.load %arg4[%145] : memref<256xi32, #tpu.memory_space<smem>>
    %c-1_i32_47 = arith.constant -1 : i32
    %147 = arith.select %136, %146, %c-1_i32_47 : i32
    %c4_48 = arith.constant 4 : index
    %148 = memref.load %arg7[%c4_48] : memref<8xi32, #tpu.memory_space<smem>>
    memref.store %147, %arg7[%c4_48] : memref<8xi32, #tpu.memory_space<smem>>
    %149 = arith.index_cast %140 : i32 to index
    %150 = memref.load %arg5[%149] : memref<256xf32, #tpu.memory_space<smem>>
    %cst_49 = arith.constant 0.000000e+00 : f32
    %151 = arith.select %136, %150, %cst_49 : f32
    %c4_50 = arith.constant 4 : index
    %152 = memref.load %arg8[%c4_50] : memref<8xf32, #tpu.memory_space<smem>>
    memref.store %151, %arg8[%c4_50] : memref<8xf32, #tpu.memory_space<smem>>
    %153 = vector.broadcast %135 : i32 to vector<2x128xi32>
    %154 = arith.cmpi eq, %131, %153 : vector<2x128xi32>
    %c1073741824_i32_51 = arith.constant 1073741824 : i32
    %155 = vector.broadcast %c1073741824_i32_51 : i32 to vector<2x128xi32>
    %156 = arith.select %154, %155, %131 : vector<2x128xi1>, vector<2x128xi32>
    %157 = vector.shape_cast %156 : vector<2x128xi32> to vector<1x2x128xi32>
    %cst_52 = arith.constant dense<2147483647> : vector<1xi32>
    %158 = vector.multi_reduction <minsi>, %157, %cst_52 [1, 2] : vector<1x2x128xi32> to vector<1xi32>
    %159 = vector.shape_cast %158 : vector<1xi32> to vector<1x1x1xi32>
    %160 = vector.extract %159[0, 0, 0] : i32 from vector<1x1x1xi32>
    %c5_i32 = arith.constant 5 : i32
    %161 = arith.cmpi slt, %c5_i32, %21 : i32
    %c255_i32_53 = arith.constant 255 : i32
    %162 = arith.minsi %160, %c255_i32_53 : i32
    %163 = arith.index_cast %162 : i32 to index
    %164 = memref.load %arg2[%163] : memref<256xi32, #tpu.memory_space<smem>>
    %165 = arith.select %23, %162, %164 : i32
    %166 = arith.index_cast %165 : i32 to index
    %167 = memref.load %arg3[%166] : memref<256xi32, #tpu.memory_space<smem>>
    %c-1_i32_54 = arith.constant -1 : i32
    %168 = arith.select %161, %167, %c-1_i32_54 : i32
    %c5 = arith.constant 5 : index
    %169 = memref.load %arg6[%c5] : memref<8xi32, #tpu.memory_space<smem>>
    memref.store %168, %arg6[%c5] : memref<8xi32, #tpu.memory_space<smem>>
    %170 = arith.index_cast %165 : i32 to index
    %171 = memref.load %arg4[%170] : memref<256xi32, #tpu.memory_space<smem>>
    %c-1_i32_55 = arith.constant -1 : i32
    %172 = arith.select %161, %171, %c-1_i32_55 : i32
    %c5_56 = arith.constant 5 : index
    %173 = memref.load %arg7[%c5_56] : memref<8xi32, #tpu.memory_space<smem>>
    memref.store %172, %arg7[%c5_56] : memref<8xi32, #tpu.memory_space<smem>>
    %174 = arith.index_cast %165 : i32 to index
    %175 = memref.load %arg5[%174] : memref<256xf32, #tpu.memory_space<smem>>
    %cst_57 = arith.constant 0.000000e+00 : f32
    %176 = arith.select %161, %175, %cst_57 : f32
    %c5_58 = arith.constant 5 : index
    %177 = memref.load %arg8[%c5_58] : memref<8xf32, #tpu.memory_space<smem>>
    memref.store %176, %arg8[%c5_58] : memref<8xf32, #tpu.memory_space<smem>>
    %178 = vector.broadcast %160 : i32 to vector<2x128xi32>
    %179 = arith.cmpi eq, %156, %178 : vector<2x128xi32>
    %c1073741824_i32_59 = arith.constant 1073741824 : i32
    %180 = vector.broadcast %c1073741824_i32_59 : i32 to vector<2x128xi32>
    %181 = arith.select %179, %180, %156 : vector<2x128xi1>, vector<2x128xi32>
    %182 = vector.shape_cast %181 : vector<2x128xi32> to vector<1x2x128xi32>
    %cst_60 = arith.constant dense<2147483647> : vector<1xi32>
    %183 = vector.multi_reduction <minsi>, %182, %cst_60 [1, 2] : vector<1x2x128xi32> to vector<1xi32>
    %184 = vector.shape_cast %183 : vector<1xi32> to vector<1x1x1xi32>
    %185 = vector.extract %184[0, 0, 0] : i32 from vector<1x1x1xi32>
    %c6_i32 = arith.constant 6 : i32
    %186 = arith.cmpi slt, %c6_i32, %21 : i32
    %c255_i32_61 = arith.constant 255 : i32
    %187 = arith.minsi %185, %c255_i32_61 : i32
    %188 = arith.index_cast %187 : i32 to index
    %189 = memref.load %arg2[%188] : memref<256xi32, #tpu.memory_space<smem>>
    %190 = arith.select %23, %187, %189 : i32
    %191 = arith.index_cast %190 : i32 to index
    %192 = memref.load %arg3[%191] : memref<256xi32, #tpu.memory_space<smem>>
    %c-1_i32_62 = arith.constant -1 : i32
    %193 = arith.select %186, %192, %c-1_i32_62 : i32
    %c6 = arith.constant 6 : index
    %194 = memref.load %arg6[%c6] : memref<8xi32, #tpu.memory_space<smem>>
    memref.store %193, %arg6[%c6] : memref<8xi32, #tpu.memory_space<smem>>
    %195 = arith.index_cast %190 : i32 to index
    %196 = memref.load %arg4[%195] : memref<256xi32, #tpu.memory_space<smem>>
    %c-1_i32_63 = arith.constant -1 : i32
    %197 = arith.select %186, %196, %c-1_i32_63 : i32
    %c6_64 = arith.constant 6 : index
    %198 = memref.load %arg7[%c6_64] : memref<8xi32, #tpu.memory_space<smem>>
    memref.store %197, %arg7[%c6_64] : memref<8xi32, #tpu.memory_space<smem>>
    %199 = arith.index_cast %190 : i32 to index
    %200 = memref.load %arg5[%199] : memref<256xf32, #tpu.memory_space<smem>>
    %cst_65 = arith.constant 0.000000e+00 : f32
    %201 = arith.select %186, %200, %cst_65 : f32
    %c6_66 = arith.constant 6 : index
    %202 = memref.load %arg8[%c6_66] : memref<8xf32, #tpu.memory_space<smem>>
    memref.store %201, %arg8[%c6_66] : memref<8xf32, #tpu.memory_space<smem>>
    %203 = vector.broadcast %185 : i32 to vector<2x128xi32>
    %204 = arith.cmpi eq, %181, %203 : vector<2x128xi32>
    %c1073741824_i32_67 = arith.constant 1073741824 : i32
    %205 = vector.broadcast %c1073741824_i32_67 : i32 to vector<2x128xi32>
    %206 = arith.select %204, %205, %181 : vector<2x128xi1>, vector<2x128xi32>
    %207 = vector.shape_cast %206 : vector<2x128xi32> to vector<1x2x128xi32>
    %cst_68 = arith.constant dense<2147483647> : vector<1xi32>
    %208 = vector.multi_reduction <minsi>, %207, %cst_68 [1, 2] : vector<1x2x128xi32> to vector<1xi32>
    %209 = vector.shape_cast %208 : vector<1xi32> to vector<1x1x1xi32>
    %210 = vector.extract %209[0, 0, 0] : i32 from vector<1x1x1xi32>
    %c7_i32 = arith.constant 7 : i32
    %211 = arith.cmpi slt, %c7_i32, %21 : i32
    %c255_i32_69 = arith.constant 255 : i32
    %212 = arith.minsi %210, %c255_i32_69 : i32
    %213 = arith.index_cast %212 : i32 to index
    %214 = memref.load %arg2[%213] : memref<256xi32, #tpu.memory_space<smem>>
    %215 = arith.select %23, %212, %214 : i32
    %216 = arith.index_cast %215 : i32 to index
    %217 = memref.load %arg3[%216] : memref<256xi32, #tpu.memory_space<smem>>
    %c-1_i32_70 = arith.constant -1 : i32
    %218 = arith.select %211, %217, %c-1_i32_70 : i32
    %c7 = arith.constant 7 : index
    %219 = memref.load %arg6[%c7] : memref<8xi32, #tpu.memory_space<smem>>
    memref.store %218, %arg6[%c7] : memref<8xi32, #tpu.memory_space<smem>>
    %220 = arith.index_cast %215 : i32 to index
    %221 = memref.load %arg4[%220] : memref<256xi32, #tpu.memory_space<smem>>
    %c-1_i32_71 = arith.constant -1 : i32
    %222 = arith.select %211, %221, %c-1_i32_71 : i32
    %c7_72 = arith.constant 7 : index
    %223 = memref.load %arg7[%c7_72] : memref<8xi32, #tpu.memory_space<smem>>
    memref.store %222, %arg7[%c7_72] : memref<8xi32, #tpu.memory_space<smem>>
    %224 = arith.index_cast %215 : i32 to index
    %225 = memref.load %arg5[%224] : memref<256xf32, #tpu.memory_space<smem>>
    %cst_73 = arith.constant 0.000000e+00 : f32
    %226 = arith.select %211, %225, %cst_73 : f32
    %c7_74 = arith.constant 7 : index
    %227 = memref.load %arg8[%c7_74] : memref<8xf32, #tpu.memory_space<smem>>
    memref.store %226, %arg8[%c7_74] : memref<8xf32, #tpu.memory_space<smem>>
    return
  }
}

</mosaic_0001>

<llo_original>
// kernel: _superpoint_proposal.1
$region0: #{_superpoint_proposal.1}
  #allocation0 [shape = 'u32[]', space=smem, size = 0x4, offset = 0x4, fixed_abs, tag = 'smem constant byte address 0x4 - core index']
  #allocation1 [shape = 'u32[72,128]{1,0:T(1,128)}', space=vmem, size = 0x9000, scoped, tag = 'internal scratch']
  %s0 = inlined_call_operand.vmem [shape: f32[2,128], index: 0, kind: input, shape index: {}]
  %s1 = inlined_call_operand.vmem [shape: s32[2,128], index: 1, kind: input, shape index: {}]
  %s2 = inlined_call_operand.vmem [shape: s32[256], index: 2, kind: input, shape index: {}]
  %s3 = inlined_call_operand.vmem [shape: s32[256], index: 3, kind: input, shape index: {}]
  %s4 = inlined_call_operand.vmem [shape: s32[256], index: 4, kind: input, shape index: {}]
  %s5 = inlined_call_operand.vmem [shape: f32[256], index: 5, kind: input, shape index: {}]
  %s6 = inlined_call_operand.hbm [shape: s32[8], index: 6, kind: output, shape index: {0}]
  %s7 = inlined_call_operand.hbm [shape: s32[8], index: 7, kind: output, shape index: {1}]
  %s8 = inlined_call_operand.hbm [shape: f32[8], index: 8, kind: output, shape index: {2}]
  %s9 = inlined_call_operand.hbm [shape: s32[1], index: 9, kind: output, shape index: {3}]
  %10 = xla_tuple %s6, %s7, %s8, %s9
  %s11 = sld [smem:[#allocation0]]
  $region74: #{_superpoint_proposal.1} parent=0
    _
  %s13 = ssub.s32 1, %s11
  %s14 = scalar_select 0, %s13, %s11
  $region1: #{_superpoint_proposal.1} parent=0
    #allocation2 [shape = 'u8[1024]{0}', space=smem, size = 0x400, scoped, tag = 'input window, operand 2, single buffered']
    #allocation3 [shape = 's32[1]{0}', space=sflag, size = 0x4, scoped, tag = 'scoped memory for _superpoint_proposal.1']
    #allocation4 [shape = 's32[1]{0}', space=sflag, size = 0x4, scoped, tag = 'scoped memory for _superpoint_proposal.1']
    #allocation5 [shape = 'u8[1024]{0}', space=smem, size = 0x400, scoped, tag = 'input window, operand 3, single buffered']
    #allocation6 [shape = 's32[1]{0}', space=sflag, size = 0x4, scoped, tag = 'scoped memory for _superpoint_proposal.1']
    #allocation7 [shape = 'u8[1024]{0}', space=smem, size = 0x400, scoped, tag = 'input window, operand 4, single buffered']
    #allocation8 [shape = 'u8[1024]{0}', space=smem, size = 0x400, scoped, tag = 'input window, operand 5, single buffered']
    #allocation9 [shape = 's32[1]{0}', space=sflag, size = 0x4, scoped, tag = 'scoped memory for _superpoint_proposal.1']
    #allocation10 [shape = 'u8[512]{0}', space=smem, size = 0x200, scoped, tag = 'output window, operand 0, single buffered']
    #allocation11 [shape = 'u8[512]{0}', space=smem, size = 0x200, scoped, tag = 'output window, operand 1, single buffered']
    #allocation12 [shape = 's32[1]{0}', space=sflag, size = 0x4, scoped, tag = 'scoped memory for _superpoint_proposal.1']
    #allocation13 [shape = 'u8[512]{0}', space=smem, size = 0x200, scoped, tag = 'output window, operand 2, single buffered']
    #allocation14 [shape = 'u8[512]{0}', space=smem, size = 0x200, scoped, tag = 'output window, operand 3, single buffered']
    #allocation15 [shape = 's32[1]{0}', space=sflag, size = 0x4, scoped, tag = 'scoped memory for _superpoint_proposal.1']
    %15 = vsyncpa [#allocation4], 0
    %16 = vsyncpa [#allocation6], 0
    %17 = vsyncpa [#allocation9], 0
    %18 = vsyncpa [#allocation3], 0
    %19 = vsyncpa [#allocation12], 0
    %20 = vsyncpa [#allocation15], 0
    // Predicated region
    $region2: #{_superpoint_proposal.1} parent=1 // pred_check
      _
    $region3: #{_superpoint_proposal.1} parent=1 // pred_check_branch
      %22 = sbr.rel (0) target = $region5
    $region4: #{_superpoint_proposal.1} parent=1 // pred_region
      _
    $region5: #{_superpoint_proposal.1} parent=1 // pred_fallthru
      _
    // Predicated region
    $region6: #{_superpoint_proposal.1} parent=1 // pred_check
      _
    $region7: #{_superpoint_proposal.1} parent=1 // pred_check_branch
      %24 = sbr.rel (0) target = $region9
    $region8: #{_superpoint_proposal.1} parent=1 // pred_region
      _
    $region9: #{_superpoint_proposal.1} parent=1 // pred_fallthru
      _
    // Predicated region
    $region10: #{_superpoint_proposal.1} parent=1 // pred_check
      _
    $region11: #{_superpoint_proposal.1} parent=1 // pred_check_branch
      %26 = sbr.rel (0) target = $region13
    $region12: #{_superpoint_proposal.1} parent=1 // pred_region
      %28 = vsyncadd [#allocation4], 0
      %s30 = sshll.u32 %s2, 4
      %s31 = int_to_ptr.vmem [resolvable:$true] %s30
      %33 = dma.vmem_to_smem %s31, 32, [#allocation2], [#allocation4]
    $region13: #{_superpoint_proposal.1} parent=1 // pred_fallthru
      _
    // Predicated region
    $region14: #{_superpoint_proposal.1} parent=1 // pred_check
      _
    $region15: #{_superpoint_proposal.1} parent=1 // pred_check_branch
      %35 = sbr.rel (0) target = $region17
    $region16: #{_superpoint_proposal.1} parent=1 // pred_region
      %37 = vsyncadd [#allocation6], 0
      %s39 = sshll.u32 %s3, 4
      %s40 = int_to_ptr.vmem [resolvable:$true] %s39
      %42 = dma.vmem_to_smem %s40, 32, [#allocation5], [#allocation6]
    $region17: #{_superpoint_proposal.1} parent=1 // pred_fallthru
      _
    // Predicated region
    $region18: #{_superpoint_proposal.1} parent=1 // pred_check
      _
    $region19: #{_superpoint_proposal.1} parent=1 // pred_check_branch
      %44 = sbr.rel (0) target = $region21
    $region20: #{_superpoint_proposal.1} parent=1 // pred_region
      %46 = vsyncadd [#allocation6], 0
      %s48 = sshll.u32 %s4, 4
      %s49 = int_to_ptr.vmem [resolvable:$true] %s48
      %51 = dma.vmem_to_smem %s49, 32, [#allocation7], [#allocation6]
    $region21: #{_superpoint_proposal.1} parent=1 // pred_fallthru
      _
    // Predicated region
    $region22: #{_superpoint_proposal.1} parent=1 // pred_check
      _
    $region23: #{_superpoint_proposal.1} parent=1 // pred_check_branch
      %53 = sbr.rel (0) target = $region25
    $region24: #{_superpoint_proposal.1} parent=1 // pred_region
      %55 = vsyncadd [#allocation9], 0
      %s57 = sshll.u32 %s5, 4
      %s58 = int_to_ptr.vmem [resolvable:$true] %s57
      %60 = dma.vmem_to_smem %s58, 32, [#allocation8], [#allocation9]
    $region25: #{_superpoint_proposal.1} parent=1 // pred_fallthru
      _
    // Predicated region
    $region26: #{_superpoint_proposal.1} parent=1 // pred_check
      _
    $region27: #{_superpoint_proposal.1} parent=1 // pred_check_branch
      %62 = sbr.rel (0) target = $region29
    $region28: #{_superpoint_proposal.1} parent=1 // pred_region
      %64 = dma.done [#allocation4], 32
    $region29: #{_superpoint_proposal.1} parent=1 // pred_fallthru
      _
    // Predicated region
    $region30: #{_superpoint_proposal.1} parent=1 // pred_check
      _
    $region31: #{_superpoint_proposal.1} parent=1 // pred_check_branch
      %66 = sbr.rel (0) target = $region33
    $region32: #{_superpoint_proposal.1} parent=1 // pred_region
      %68 = dma.done [#allocation6], 32
    $region33: #{_superpoint_proposal.1} parent=1 // pred_fallthru
      _
    // Predicated region
    $region34: #{_superpoint_proposal.1} parent=1 // pred_check
      _
    $region35: #{_superpoint_proposal.1} parent=1 // pred_check_branch
      %70 = sbr.rel (0) target = $region37
    $region36: #{_superpoint_proposal.1} parent=1 // pred_region
      %72 = dma.done [#allocation6], 32
    $region37: #{_superpoint_proposal.1} parent=1 // pred_fallthru
      _
    // Predicated region
    $region38: #{_superpoint_proposal.1} parent=1 // pred_check
      _
    $region39: #{_superpoint_proposal.1} parent=1 // pred_check_branch
      %74 = sbr.rel (0) target = $region41
    $region40: #{_superpoint_proposal.1} parent=1 // pred_region
      %76 = dma.done [#allocation9], 32
    $region41: #{_superpoint_proposal.1} parent=1 // pred_fallthru
      _
    %77 = sfence
    %v78 = vld [vmem:[%s0] sm:$0x3]
    %v79 = vld [vmem:[%s1] sm:$0x3]
    %vm80 = vcmask 1041408
    %v81 = vsel %vm80, %v78, -inf
    %82 = vmax.xlane.f32.xlu0 %v81
    %v83 = vpop.xlane.xlu0 %82
    %v84 = vrot.slane %v83, 4
    %v85 = vmax.f32 %v83, %v84
    %v86 = vrot.slane %v85, 2
    %v87 = vmax.f32 %v85, %v86
    %v88 = vrot.slane %v87, 1
    %v89 = vmax.f32 %v87, %v88
    %s90 = vtos %v89
    %p91 = scmp.gt.f32.partialorder %s90, 0.3
    %s92 = ssub.f32 0.3, %s90
    %v93 = vrcp.pop 0.05
    %v94 = vmul.f32 0.05, %v93
    %v95 = vsub.f32 1.0, %v94
    %v96 = vmul.f32 %v93, %v95
    %v97 = vadd.f32 %v93, %v96
    %vm98 = vweird.f32 %v93
    %v99 = vsel %vm98, %v93, %v97
    %s100 = vtos %v99
    %s101 = smul.f32 %s92, %s100
    %s102 = sfloor.f32 %s101
    %s103 = sadd.f32 %s102, 1.0
    %s104 = scalar_select %p91, 0.0, %s103
    %s105 = smul.f32 %s104, 0.05
    %s106 = ssub.f32 0.3, %s105
    %v107 = vstv %s106
    %vm108 = vcmp.gt.f32.partialorder %v78, %v107
    %v109 = vsel %vm108, 1, 0
    %v110 = vsel %vm80, %v109, 0
    %v111 = vand.u32 %v110, 65535
    %v112 = vshrl.u32 %v110, 16
    %v113 = vcvt.s32.f32 %v111
    %v114 = vcvt.s32.f32 %v112
    %115 = vadd.xlane.f32.xlu0 %v113
    %v116 = vpop.xlane.xlu0 %115
    %117 = vadd.xlane.f32.xlu0 %v114
    %v118 = vpop.xlane.xlu0 %117
    %v119 = vcvt.f32.s32 %v116
    %v120 = vcvt.f32.s32 %v118
    %v121 = vshll.u32 %v120, 16
    %v122 = vadd.s32 %v121, %v119
    %v123 = vrot.slane %v122, 4
    %v124 = vadd.s32 %v122, %v123
    %v125 = vrot.slane %v124, 2
    %v126 = vadd.s32 %v124, %v125
    %v127 = vrot.slane %v126, 1
    %v128 = vadd.s32 %v126, %v127
    %s129 = vtos %v128
    %p130 = scmp.lt.s32.totalorder %s129, 8
    %s131 = scalar_select %p130, %s129, 8
    %s132 = scalar_lea.smem [#allocation14], 0
    %133 = sst [smem:[%s132]] %s131
    %p134 = scmp.le.s32.totalorder %s129, 8
    %v135 = vlaneseq
    %v136 = vshrl.u32 %v135, 7
    %v137 = vlaneseq
    %v138 = vand.u32 %v137, 127
    %v139 = vmul.u32 %v136, 128
    %v140 = vadd.s32 %v139, %v138
    %s141 = scalar_select %p134, 1, 0
    %v142 = vstv %s141
    %vm143 = vcmp.eq.s32.totalorder %v142, 1
    %v144 = vsel %vm143, %v140, %v79
    %v145 = vsel %vm108, %v144, 1073741824
    %v146 = vsel %vm80, %v145, 2147483647
    %v147 = vand.u32 %v146, 65535
    %v148 = vshra.s32 %v146, 16
    %v149 = vcvt.s32.f32 %v147
    %v150 = vcvt.s32.f32 %v148
    %151 = vmin.xlane.f32.xlu0 %v150
    %v152 = vpop.xlane.xlu0 %151
    %vm153 = vcmp.eq.f32.partialorder %v150, %v152
    %v154 = vsel %vm153, %v149, inf
    %155 = vmin.xlane.f32.xlu0 %v154
    %v156 = vpop.xlane.xlu0 %155
    %v157 = vcvt.f32.s32 %v156
    %v158 = vcvt.f32.s32 %v152
    %v159 = vshll.u32 %v158, 16
    %v160 = vadd.s32 %v159, %v157
    %v161 = vrot.slane %v160, 4
    %vm162 = vcmp.lt.s32.totalorder %v160, %v161
    %v163 = vsel %vm162, %v160, %v161
    %v164 = vrot.slane %v163, 2
    %vm165 = vcmp.lt.s32.totalorder %v163, %v164
    %v166 = vsel %vm165, %v163, %v164
    %v167 = vrot.slane %v166, 1
    %vm168 = vcmp.lt.s32.totalorder %v166, %v167
    %v169 = vsel %vm168, %v166, %v167
    %s170 = vtos %v169
    %p171 = scmp.gt.s32.totalorder %s131, 0
    %p172 = scmp.lt.s32.totalorder %s170, 255
    %s173 = scalar_select %p172, %s170, 255
    %s174 = sld [smem:[#allocation2 + %s173]]
    %s175 = scalar_select %p134, %s173, %s174
    %s176 = sld [smem:[#allocation5 + %s175]]
    %s177 = scalar_select %p171, %s176, 4294967295
    %s178 = scalar_lea.smem [#allocation10], 0
    %179 = sst [smem:[%s178]] %s177
    %s180 = sld [smem:[#allocation7 + %s175]]
    %s181 = scalar_select %p171, %s180, 4294967295
    %s182 = scalar_lea.smem [#allocation11], 0
    %183 = sst [smem:[%s182]] %s181
    %s184 = sld [smem:[#allocation8 + %s175]]
    %s185 = scalar_select %p171, %s184, 0.0
    %s186 = scalar_lea.smem [#allocation13], 0
    %187 = sst [smem:[%s186]] %s185
    %v188 = vstv %s170
    %vm189 = vcmp.eq.s32.totalorder %v145, %v188
    %v190 = vsel %vm189, 1073741824, %v145
    %v191 = vsel %vm80, %v190, 2147483647
    %v192 = vand.u32 %v191, 65535
    %v193 = vshra.s32 %v191, 16
    %v194 = vcvt.s32.f32 %v192
    %v195 = vcvt.s32.f32 %v193
    %196 = vmin.xlane.f32.xlu0 %v195
    %v197 = vpop.xlane.xlu0 %196
    %vm198 = vcmp.eq.f32.partialorder %v195, %v197
    %v199 = vsel %vm198, %v194, inf
    %200 = vmin.xlane.f32.xlu0 %v199
    %v201 = vpop.xlane.xlu0 %200
    %v202 = vcvt.f32.s32 %v201
    %v203 = vcvt.f32.s32 %v197
    %v204 = vshll.u32 %v203, 16
    %v205 = vadd.s32 %v204, %v202
    %v206 = vrot.slane %v205, 4
    %vm207 = vcmp.lt.s32.totalorder %v205, %v206
    %v208 = vsel %vm207, %v205, %v206
    %v209 = vrot.slane %v208, 2
    %vm210 = vcmp.lt.s32.totalorder %v208, %v209
    %v211 = vsel %vm210, %v208, %v209
    %v212 = vrot.slane %v211, 1
    %vm213 = vcmp.lt.s32.totalorder %v211, %v212
    %v214 = vsel %vm213, %v211, %v212
    %s215 = vtos %v214
    %p216 = scmp.gt.s32.totalorder %s131, 1
    %p217 = scmp.lt.s32.totalorder %s215, 255
    %s218 = scalar_select %p217, %s215, 255
    %s219 = sld [smem:[#allocation2 + %s218]]
    %s220 = scalar_select %p134, %s218, %s219
    %s221 = sld [smem:[#allocation5 + %s220]]
    %s222 = scalar_select %p216, %s221, 4294967295
    %s223 = scalar_lea.smem [#allocation10], 1
    %224 = sst [smem:[%s223]] %s222
    %s225 = sld [smem:[#allocation7 + %s220]]
    %s226 = scalar_select %p216, %s225, 4294967295
    %s227 = scalar_lea.smem [#allocation11], 1
    %228 = sst [smem:[%s227]] %s226
    %s229 = sld [smem:[#allocation8 + %s220]]
    %s230 = scalar_select %p216, %s229, 0.0
    %s231 = scalar_lea.smem [#allocation13], 1
    %232 = sst [smem:[%s231]] %s230
    %v233 = vstv %s215
    %vm234 = vcmp.eq.s32.totalorder %v190, %v233
    %v235 = vsel %vm234, 1073741824, %v190
    %v236 = vsel %vm80, %v235, 2147483647
    %v237 = vand.u32 %v236, 65535
    %v238 = vshra.s32 %v236, 16
    %v239 = vcvt.s32.f32 %v237
    %v240 = vcvt.s32.f32 %v238
    %241 = vmin.xlane.f32.xlu0 %v240
    %v242 = vpop.xlane.xlu0 %241
    %vm243 = vcmp.eq.f32.partialorder %v240, %v242
    %v244 = vsel %vm243, %v239, inf
    %245 = vmin.xlane.f32.xlu0 %v244
    %v246 = vpop.xlane.xlu0 %245
    %v247 = vcvt.f32.s32 %v246
    %v248 = vcvt.f32.s32 %v242
    %v249 = vshll.u32 %v248, 16
    %v250 = vadd.s32 %v249, %v247
    %v251 = vrot.slane %v250, 4
    %vm252 = vcmp.lt.s32.totalorder %v250, %v251
    %v253 = vsel %vm252, %v250, %v251
    %v254 = vrot.slane %v253, 2
    %vm255 = vcmp.lt.s32.totalorder %v253, %v254
    %v256 = vsel %vm255, %v253, %v254
    %v257 = vrot.slane %v256, 1
    %vm258 = vcmp.lt.s32.totalorder %v256, %v257
    %v259 = vsel %vm258, %v256, %v257
    %s260 = vtos %v259
    %p261 = scmp.gt.s32.totalorder %s131, 2
    %p262 = scmp.lt.s32.totalorder %s260, 255
    %s263 = scalar_select %p262, %s260, 255
    %s264 = sld [smem:[#allocation2 + %s263]]
    %s265 = scalar_select %p134, %s263, %s264
    %s266 = sld [smem:[#allocation5 + %s265]]
    %s267 = scalar_select %p261, %s266, 4294967295
    %s268 = scalar_lea.smem [#allocation10], 2
    %269 = sst [smem:[%s268]] %s267
    %s270 = sld [smem:[#allocation7 + %s265]]
    %s271 = scalar_select %p261, %s270, 4294967295
    %s272 = scalar_lea.smem [#allocation11], 2
    %273 = sst [smem:[%s272]] %s271
    %s274 = sld [smem:[#allocation8 + %s265]]
    %s275 = scalar_select %p261, %s274, 0.0
    %s276 = scalar_lea.smem [#allocation13], 2
    %277 = sst [smem:[%s276]] %s275
    %v278 = vstv %s260
    %vm279 = vcmp.eq.s32.totalorder %v235, %v278
    %v280 = vsel %vm279, 1073741824, %v235
    %v281 = vsel %vm80, %v280, 2147483647
    %v282 = vand.u32 %v281, 65535
    %v283 = vshra.s32 %v281, 16
    %v284 = vcvt.s32.f32 %v282
    %v285 = vcvt.s32.f32 %v283
    %286 = vmin.xlane.f32.xlu0 %v285
    %v287 = vpop.xlane.xlu0 %286
    %vm288 = vcmp.eq.f32.partialorder %v285, %v287
    %v289 = vsel %vm288, %v284, inf
    %290 = vmin.xlane.f32.xlu0 %v289
    %v291 = vpop.xlane.xlu0 %290
    %v292 = vcvt.f32.s32 %v291
    %v293 = vcvt.f32.s32 %v287
    %v294 = vshll.u32 %v293, 16
    %v295 = vadd.s32 %v294, %v292
    %v296 = vrot.slane %v295, 4
    %vm297 = vcmp.lt.s32.totalorder %v295, %v296
    %v298 = vsel %vm297, %v295, %v296
    %v299 = vrot.slane %v298, 2
    %vm300 = vcmp.lt.s32.totalorder %v298, %v299
    %v301 = vsel %vm300, %v298, %v299
    %v302 = vrot.slane %v301, 1
    %vm303 = vcmp.lt.s32.totalorder %v301, %v302
    %v304 = vsel %vm303, %v301, %v302
    %s305 = vtos %v304
    %p306 = scmp.gt.s32.totalorder %s131, 3
    %p307 = scmp.lt.s32.totalorder %s305, 255
    %s308 = scalar_select %p307, %s305, 255
    %s309 = sld [smem:[#allocation2 + %s308]]
    %s310 = scalar_select %p134, %s308, %s309
    %s311 = sld [smem:[#allocation5 + %s310]]
    %s312 = scalar_select %p306, %s311, 4294967295
    %s313 = scalar_lea.smem [#allocation10], 3
    %314 = sst [smem:[%s313]] %s312
    %s315 = sld [smem:[#allocation7 + %s310]]
    %s316 = scalar_select %p306, %s315, 4294967295
    %s317 = scalar_lea.smem [#allocation11], 3
    %318 = sst [smem:[%s317]] %s316
    %s319 = sld [smem:[#allocation8 + %s310]]
    %s320 = scalar_select %p306, %s319, 0.0
    %s321 = scalar_lea.smem [#allocation13], 3
    %322 = sst [smem:[%s321]] %s320
    %v323 = vstv %s305
    %vm324 = vcmp.eq.s32.totalorder %v280, %v323
    %v325 = vsel %vm324, 1073741824, %v280
    %v326 = vsel %vm80, %v325, 2147483647
    %v327 = vand.u32 %v326, 65535
    %v328 = vshra.s32 %v326, 16
    %v329 = vcvt.s32.f32 %v327
    %v330 = vcvt.s32.f32 %v328
    %331 = vmin.xlane.f32.xlu0 %v330
    %v332 = vpop.xlane.xlu0 %331
    %vm333 = vcmp.eq.f32.partialorder %v330, %v332
    %v334 = vsel %vm333, %v329, inf
    %335 = vmin.xlane.f32.xlu0 %v334
    %v336 = vpop.xlane.xlu0 %335
    %v337 = vcvt.f32.s32 %v336
    %v338 = vcvt.f32.s32 %v332
    %v339 = vshll.u32 %v338, 16
    %v340 = vadd.s32 %v339, %v337
    %v341 = vrot.slane %v340, 4
    %vm342 = vcmp.lt.s32.totalorder %v340, %v341
    %v343 = vsel %vm342, %v340, %v341
    %v344 = vrot.slane %v343, 2
    %vm345 = vcmp.lt.s32.totalorder %v343, %v344
    %v346 = vsel %vm345, %v343, %v344
    %v347 = vrot.slane %v346, 1
    %vm348 = vcmp.lt.s32.totalorder %v346, %v347
    %v349 = vsel %vm348, %v346, %v347
    %s350 = vtos %v349
    %p351 = scmp.gt.s32.totalorder %s131, 4
    %p352 = scmp.lt.s32.totalorder %s350, 255
    %s353 = scalar_select %p352, %s350, 255
    %s354 = sld [smem:[#allocation2 + %s353]]
    %s355 = scalar_select %p134, %s353, %s354
    %s356 = sld [smem:[#allocation5 + %s355]]
    %s357 = scalar_select %p351, %s356, 4294967295
    %s358 = scalar_lea.smem [#allocation10], 4
    %359 = sst [smem:[%s358]] %s357
    %s360 = sld [smem:[#allocation7 + %s355]]
    %s361 = scalar_select %p351, %s360, 4294967295
    %s362 = scalar_lea.smem [#allocation11], 4
    %363 = sst [smem:[%s362]] %s361
    %s364 = sld [smem:[#allocation8 + %s355]]
    %s365 = scalar_select %p351, %s364, 0.0
    %s366 = scalar_lea.smem [#allocation13], 4
    %367 = sst [smem:[%s366]] %s365
    %v368 = vstv %s350
    %vm369 = vcmp.eq.s32.totalorder %v325, %v368
    %v370 = vsel %vm369, 1073741824, %v325
    %v371 = vsel %vm80, %v370, 2147483647
    %v372 = vand.u32 %v371, 65535
    %v373 = vshra.s32 %v371, 16
    %v374 = vcvt.s32.f32 %v372
    %v375 = vcvt.s32.f32 %v373
    %376 = vmin.xlane.f32.xlu0 %v375
    %v377 = vpop.xlane.xlu0 %376
    %vm378 = vcmp.eq.f32.partialorder %v375, %v377
    %v379 = vsel %vm378, %v374, inf
    %380 = vmin.xlane.f32.xlu0 %v379
    %v381 = vpop.xlane.xlu0 %380
    %v382 = vcvt.f32.s32 %v381
    %v383 = vcvt.f32.s32 %v377
    %v384 = vshll.u32 %v383, 16
    %v385 = vadd.s32 %v384, %v382
    %v386 = vrot.slane %v385, 4
    %vm387 = vcmp.lt.s32.totalorder %v385, %v386
    %v388 = vsel %vm387, %v385, %v386
    %v389 = vrot.slane %v388, 2
    %vm390 = vcmp.lt.s32.totalorder %v388, %v389
    %v391 = vsel %vm390, %v388, %v389
    %v392 = vrot.slane %v391, 1
    %vm393 = vcmp.lt.s32.totalorder %v391, %v392
    %v394 = vsel %vm393, %v391, %v392
    %s395 = vtos %v394
    %p396 = scmp.gt.s32.totalorder %s131, 5
    %p397 = scmp.lt.s32.totalorder %s395, 255
    %s398 = scalar_select %p397, %s395, 255
    %s399 = sld [smem:[#allocation2 + %s398]]
    %s400 = scalar_select %p134, %s398, %s399
    %s401 = sld [smem:[#allocation5 + %s400]]
    %s402 = scalar_select %p396, %s401, 4294967295
    %s403 = scalar_lea.smem [#allocation10], 5
    %404 = sst [smem:[%s403]] %s402
    %s405 = sld [smem:[#allocation7 + %s400]]
    %s406 = scalar_select %p396, %s405, 4294967295
    %s407 = scalar_lea.smem [#allocation11], 5
    %408 = sst [smem:[%s407]] %s406
    %s409 = sld [smem:[#allocation8 + %s400]]
    %s410 = scalar_select %p396, %s409, 0.0
    %s411 = scalar_lea.smem [#allocation13], 5
    %412 = sst [smem:[%s411]] %s410
    %v413 = vstv %s395
    %vm414 = vcmp.eq.s32.totalorder %v370, %v413
    %v415 = vsel %vm414, 1073741824, %v370
    %v416 = vsel %vm80, %v415, 2147483647
    %v417 = vand.u32 %v416, 65535
    %v418 = vshra.s32 %v416, 16
    %v419 = vcvt.s32.f32 %v417
    %v420 = vcvt.s32.f32 %v418
    %421 = vmin.xlane.f32.xlu0 %v420
    %v422 = vpop.xlane.xlu0 %421
    %vm423 = vcmp.eq.f32.partialorder %v420, %v422
    %v424 = vsel %vm423, %v419, inf
    %425 = vmin.xlane.f32.xlu0 %v424
    %v426 = vpop.xlane.xlu0 %425
    %v427 = vcvt.f32.s32 %v426
    %v428 = vcvt.f32.s32 %v422
    %v429 = vshll.u32 %v428, 16
    %v430 = vadd.s32 %v429, %v427
    %v431 = vrot.slane %v430, 4
    %vm432 = vcmp.lt.s32.totalorder %v430, %v431
    %v433 = vsel %vm432, %v430, %v431
    %v434 = vrot.slane %v433, 2
    %vm435 = vcmp.lt.s32.totalorder %v433, %v434
    %v436 = vsel %vm435, %v433, %v434
    %v437 = vrot.slane %v436, 1
    %vm438 = vcmp.lt.s32.totalorder %v436, %v437
    %v439 = vsel %vm438, %v436, %v437
    %s440 = vtos %v439
    %p441 = scmp.gt.s32.totalorder %s131, 6
    %p442 = scmp.lt.s32.totalorder %s440, 255
    %s443 = scalar_select %p442, %s440, 255
    %s444 = sld [smem:[#allocation2 + %s443]]
    %s445 = scalar_select %p134, %s443, %s444
    %s446 = sld [smem:[#allocation5 + %s445]]
    %s447 = scalar_select %p441, %s446, 4294967295
    %s448 = scalar_lea.smem [#allocation10], 6
    %449 = sst [smem:[%s448]] %s447
    %s450 = sld [smem:[#allocation7 + %s445]]
    %s451 = scalar_select %p441, %s450, 4294967295
    %s452 = scalar_lea.smem [#allocation11], 6
    %453 = sst [smem:[%s452]] %s451
    %s454 = sld [smem:[#allocation8 + %s445]]
    %s455 = scalar_select %p441, %s454, 0.0
    %s456 = scalar_lea.smem [#allocation13], 6
    %457 = sst [smem:[%s456]] %s455
    %v458 = vstv %s440
    %vm459 = vcmp.eq.s32.totalorder %v415, %v458
    %v460 = vsel %vm459, 1073741824, %v415
    %v461 = vsel %vm80, %v460, 2147483647
    %v462 = vand.u32 %v461, 65535
    %v463 = vshra.s32 %v461, 16
    %v464 = vcvt.s32.f32 %v462
    %v465 = vcvt.s32.f32 %v463
    %466 = vmin.xlane.f32.xlu0 %v465
    %v467 = vpop.xlane.xlu0 %466
    %vm468 = vcmp.eq.f32.partialorder %v465, %v467
    %v469 = vsel %vm468, %v464, inf
    %470 = vmin.xlane.f32.xlu0 %v469
    %v471 = vpop.xlane.xlu0 %470
    %v472 = vcvt.f32.s32 %v471
    %v473 = vcvt.f32.s32 %v467
    %v474 = vshll.u32 %v473, 16
    %v475 = vadd.s32 %v474, %v472
    %v476 = vrot.slane %v475, 4
    %vm477 = vcmp.lt.s32.totalorder %v475, %v476
    %v478 = vsel %vm477, %v475, %v476
    %v479 = vrot.slane %v478, 2
    %vm480 = vcmp.lt.s32.totalorder %v478, %v479
    %v481 = vsel %vm480, %v478, %v479
    %v482 = vrot.slane %v481, 1
    %vm483 = vcmp.lt.s32.totalorder %v481, %v482
    %v484 = vsel %vm483, %v481, %v482
    %s485 = vtos %v484
    %p486 = scmp.gt.s32.totalorder %s131, 7
    %p487 = scmp.lt.s32.totalorder %s485, 255
    %s488 = scalar_select %p487, %s485, 255
    %s489 = sld [smem:[#allocation2 + %s488]]
    %s490 = scalar_select %p134, %s488, %s489
    %s491 = sld [smem:[#allocation5 + %s490]]
    %s492 = scalar_select %p486, %s491, 4294967295
    %s493 = scalar_lea.smem [#allocation10], 7
    %494 = sst [smem:[%s493]] %s492
    %s495 = sld [smem:[#allocation7 + %s490]]
    %s496 = scalar_select %p486, %s495, 4294967295
    %s497 = scalar_lea.smem [#allocation11], 7
    %498 = sst [smem:[%s497]] %s496
    %s499 = sld [smem:[#allocation8 + %s490]]
    %s500 = scalar_select %p486, %s499, 0.0
    %s501 = scalar_lea.smem [#allocation13], 7
    %502 = sst [smem:[%s501]] %s500
    // Predicated region
    $region42: #{_superpoint_proposal.1} parent=1 // pred_check
      _
    $region43: #{_superpoint_proposal.1} parent=1 // pred_check_branch
      %504 = sbr.rel (0) target = $region45
    $region44: #{_superpoint_proposal.1} parent=1 // pred_region
      %506 = vsyncadd [#allocation3], 0
      %s508 = sshll.u32 %s6, 4
      %s509 = int_to_ptr.hbm [resolvable:$true] %s508
      %511 = dma.smem_to_hbm [#allocation10], 16, %s509, [#allocation3]
    $region45: #{_superpoint_proposal.1} parent=1 // pred_fallthru
      _
    // Predicated region
    $region46: #{_superpoint_proposal.1} parent=1 // pred_check
      _
    $region47: #{_superpoint_proposal.1} parent=1 // pred_check_branch
      %513 = sbr.rel (0) target = $region49
    $region48: #{_superpoint_proposal.1} parent=1 // pred_region
      %515 = vsyncadd [#allocation12], 0
      %s517 = sshll.u32 %s7, 4
      %s518 = int_to_ptr.hbm [resolvable:$true] %s517
      %520 = dma.smem_to_hbm [#allocation11], 16, %s518, [#allocation12]
    $region49: #{_superpoint_proposal.1} parent=1 // pred_fallthru
      _
    // Predicated region
    $region50: #{_superpoint_proposal.1} parent=1 // pred_check
      _
    $region51: #{_superpoint_proposal.1} parent=1 // pred_check_branch
      %522 = sbr.rel (0) target = $region53
    $region52: #{_superpoint_proposal.1} parent=1 // pred_region
      %524 = vsyncadd [#allocation12], 0
      %s526 = sshll.u32 %s8, 4
      %s527 = int_to_ptr.hbm [resolvable:$true] %s526
      %529 = dma.smem_to_hbm [#allocation13], 16, %s527, [#allocation12]
    $region53: #{_superpoint_proposal.1} parent=1 // pred_fallthru
      _
    // Predicated region
    $region54: #{_superpoint_proposal.1} parent=1 // pred_check
      _
    $region55: #{_superpoint_proposal.1} parent=1 // pred_check_branch
      %531 = sbr.rel (0) target = $region57
    $region56: #{_superpoint_proposal.1} parent=1 // pred_region
      %533 = vsyncadd [#allocation15], 0
      %s535 = sshll.u32 %s9, 4
      %s536 = int_to_ptr.hbm [resolvable:$true] %s535
      %538 = dma.smem_to_hbm [#allocation14], 16, %s536, [#allocation15]
    $region57: #{_superpoint_proposal.1} parent=1 // pred_fallthru
      _
    // Predicated region
    $region58: #{_superpoint_proposal.1} parent=1 // pred_check
      _
    $region59: #{_superpoint_proposal.1} parent=1 // pred_check_branch
      %540 = sbr.rel (0) target = $region61
    $region60: #{_superpoint_proposal.1} parent=1 // pred_region
      %542 = dma.done [#allocation3], 16
    $region61: #{_superpoint_proposal.1} parent=1 // pred_fallthru
      _
    // Predicated region
    $region62: #{_superpoint_proposal.1} parent=1 // pred_check
      _
    $region63: #{_superpoint_proposal.1} parent=1 // pred_check_branch
      %544 = sbr.rel (0) target = $region65
    $region64: #{_superpoint_proposal.1} parent=1 // pred_region
      %546 = dma.done [#allocation12], 16
    $region65: #{_superpoint_proposal.1} parent=1 // pred_fallthru
      _
    // Predicated region
    $region66: #{_superpoint_proposal.1} parent=1 // pred_check
      _
    $region67: #{_superpoint_proposal.1} parent=1 // pred_check_branch
      %548 = sbr.rel (0) target = $region69
    $region68: #{_superpoint_proposal.1} parent=1 // pred_region
      %550 = dma.done [#allocation12], 16
    $region69: #{_superpoint_proposal.1} parent=1 // pred_fallthru
      _
    // Predicated region
    $region70: #{_superpoint_proposal.1} parent=1 // pred_check
      _
    $region71: #{_superpoint_proposal.1} parent=1 // pred_check_branch
      %552 = sbr.rel (0) target = $region73
    $region72: #{_superpoint_proposal.1} parent=1 // pred_region
      %554 = dma.done [#allocation15], 16
    $region73: #{_superpoint_proposal.1} parent=1 // pred_fallthru
      _
    %555 = sfence
    %556 = vsyncpa [#allocation3], 1
    %557 = vsyncpa [#allocation12], 1
    %558 = vsyncpa [#allocation15], 1
    %559 = vsyncpa [#allocation4], 1
    %560 = vsyncpa [#allocation6], 1
    %561 = vsyncpa [#allocation9], 1

</llo_original>
